<compile_context>
chip_gen: v6e
topology: v6e:2x2x1
jax: 0.10.0
libtpu: 0.0.40
codegen_flags: <defaults>
</compile_context>

<pallas_src>
import functools

import numpy as np
import jax
import jax.numpy as jnp
from jax.experimental import pallas as pl
from jax.experimental.pallas import tpu as pltpu


def orthogonal_init(shape, std, seed):
    """Deterministic orthogonal init matching torch.nn.init.orthogonal_ semantics.

    `shape` is the PyTorch Linear weight shape (out_features, in_features).
    """
    rng = np.random.default_rng(seed)
    rows, cols = shape
    flat = rng.standard_normal((rows, cols)).astype(np.float64)
    if rows < cols:
        flat = flat.T
    q, r = np.linalg.qr(flat)
    d = np.sign(np.diag(r))
    d[d == 0] = 1.0
    q = q * d[None, :]
    if rows < cols:
        q = q.T
    return (std * q).astype(np.float32)


def anet_kernel(x_ref, w1_ref, b1_ref, w2_ref, b2_ref, w3_ref, b3_ref, o_ref,
                *, a_max):
    # x: (state_n, tb) — batch on the lane axis.
    x = x_ref[...]
    h1 = jnp.dot(w1_ref[...], x, preferred_element_type=jnp.float32) + b1_ref[...]
    h1 = jnp.maximum(h1, 0.0)                       # (net_width, tb), full-lane VPU
    h2 = jnp.dot(w2_ref[...], h1, preferred_element_type=jnp.float32) + b2_ref[...]
    h2 = jnp.maximum(h2, 0.0)
    a = jnp.dot(w3_ref[...], h2, preferred_element_type=jnp.float32) + b3_ref[...]
    # (action_n, tb): lane-dense output slab; tanh -> EUP, a_max is a constant.
    o_ref[...] = jnp.tanh(a) * a_max


def _round_up(x, m):
    return ((x + m - 1) // m) * m


def a_net_forward(s, params, a_max, *, tb=8192, lane_tile=256):
    """Full A_net forward in one Pallas kernel, batch tiled along lanes.

    s: (B, state_n) float32. Returns (B, action_n) float32, matching PyTorch.
    """
    w1, b1, w2, b2, w3, b3 = params
    B, state_n = s.shape
    net_width = w1.shape[0]
    action_n = w3.shape[0]

    # Batch-on-lanes layout: one wrapper-side transpose (layout plumbing).
    s_t = s.T                                               # (state_n, B)

    # Lane-tile selection:
    #  * small batches -> single full-extent block (always legal),
    #  * otherwise round to a 256-lane multiple (fills the 2x256x256 MXU on
    #    v6e/v7x) and cap so there are >= 2 grid steps (v7x megacore split).
    if B <= lane_tile:
        tb_eff = B
    else:
        half = _round_up(pl.cdiv(B, 2), lane_tile)
        tb_eff = min(_round_up(min(tb, B), lane_tile), half)
        tb_eff = max(tb_eff, lane_tile)
    grid = (pl.cdiv(B, tb_eff),)

    # Weights/biases: one full-array block, same block index every grid step
    # -> stay resident in VMEM while the activation tile streams.
    resident = lambda shape: pl.BlockSpec(shape, lambda i: (0, 0))

    kernel = functools.partial(anet_kernel, a_max=float(a_max))

    out_t = pl.pallas_call(
        kernel,
        out_shape=jax.ShapeDtypeStruct((action_n, B), jnp.float32),
        grid=grid,
        in_specs=[
            pl.BlockSpec((state_n, tb_eff), lambda i: (0, i)),  # s^T (streamed)
            resident((net_width, state_n)),                     # W1 (out, in)
            resident((net_width, 1)),                           # b1 (column)
            resident((net_width, net_width)),                   # W2
            resident((net_width, 1)),                           # b2
            resident((action_n, net_width)),                    # W3
            resident((action_n, 1)),                            # b3
        ],
        out_specs=pl.BlockSpec((action_n, tb_eff), lambda i: (0, i)),
        compiler_params=pltpu.CompilerParams(
            dimension_semantics=("parallel",),                  # 2 TCs on v7x
        ),
    )(s_t, w1, b1, w2, b2, w3, b3)

    return out_t.T                                              # (B, action_n)


def make_params(state_n, action_n, net_width):
    std = float(np.sqrt(2.0))
    # Keep PyTorch Linear weight order (out, in); the kernel computes W @ x.
    w1 = orthogonal_init((net_width, state_n), std, seed=1)
    w2 = orthogonal_init((net_width, net_width), std, seed=2)
    w3 = orthogonal_init((action_n, net_width), std, seed=3)
    # nn.init.constant_(bias, 0.0) -> zero biases, stored as columns.
    b1 = np.zeros((net_width, 1), np.float32)
    b2 = np.zeros((net_width, 1), np.float32)
    b3 = np.zeros((action_n, 1), np.float32)
    return tuple(jnp.asarray(p) for p in (w1, b1, w2, b2, w3, b3))


def _reference(s, params, a_max):
    w1, b1, w2, b2, w3, b3 = params
    h1 = jnp.maximum(s @ w1.T + b1.T, 0.0)
    h2 = jnp.maximum(h1 @ w2.T + b2.T, 0.0)
    return jnp.tanh(h2 @ w3.T + b3.T) * a_max


if __name__ == "__main__":
    state_n = 16
    action_n = 4
    net_width = 32
    a_range = (-2.0, 2.0)
    a_max = a_range[-1]

    params = make_params(state_n, action_n, net_width)
    key = jax.random.PRNGKey(0)

    # Case 1: multi-step grid (exercises lane tiling + megacore split path).
    s_big = jax.random.normal(key, (512, state_n), dtype=jnp.float32)
    out_big = jax.block_until_ready(a_net_forward(s_big, params, a_max))
    ref_big = _reference(s_big, params, a_max)
    assert out_big.shape == (512, action_n)
    np.testing.assert_allclose(np.asarray(out_big), np.asarray(ref_big),
                               rtol=1e-5, atol=1e-5)

    # Case 2: tiny batch (single full-extent block path).
    s_small = jax.random.normal(jax.random.PRNGKey(1), (8, state_n),
                                dtype=jnp.float32)
    out_small = jax.block_until_ready(a_net_forward(s_small, params, a_max))
    ref_small = _reference(s_small, params, a_max)
    assert out_small.shape == (8, action_n)
    np.testing.assert_allclose(np.asarray(out_small), np.asarray(ref_small),
                               rtol=1e-5, atol=1e-5)

    print("KERNEL_OK")
</pallas_src>

<mosaic_0001>
module attributes {stable_mosaic.version = 11 : i64} {
  func.func @anet_kernel(%arg0: i32, %arg1: memref<16x256xf32, #tpu.memory_space<vmem>>, %arg2: memref<32x16xf32, #tpu.memory_space<vmem>>, %arg3: memref<32x1xf32, #tpu.memory_space<vmem>>, %arg4: memref<32x32xf32, #tpu.memory_space<vmem>>, %arg5: memref<32x1xf32, #tpu.memory_space<vmem>>, %arg6: memref<4x32xf32, #tpu.memory_space<vmem>>, %arg7: memref<4x1xf32, #tpu.memory_space<vmem>>, %arg8: memref<4x256xf32, #tpu.memory_space<vmem>>) attributes {dimension_semantics = [#tpu.dimension_semantics<parallel>], iteration_bounds = array<i64: 2>, scalar_prefetch = 0 : i64, scratch_operands = 0 : i64, tpu.core_type = #tpu.core_type<tc>, window_params = [{transform_indices = @transform_0, window_bounds = array<i64: 16, 256>}, {pipeline_mode = #tpu.pipeline_mode<synchronous>, transform_indices = @transform_1, window_bounds = array<i64: 32, 16>}, {pipeline_mode = #tpu.pipeline_mode<synchronous>, transform_indices = @transform_2, window_bounds = array<i64: 32, 1>}, {pipeline_mode = #tpu.pipeline_mode<synchronous>, transform_indices = @transform_3, window_bounds = array<i64: 32, 32>}, {pipeline_mode = #tpu.pipeline_mode<synchronous>, transform_indices = @transform_4, window_bounds = array<i64: 32, 1>}, {pipeline_mode = #tpu.pipeline_mode<synchronous>, transform_indices = @transform_5, window_bounds = array<i64: 4, 32>}, {pipeline_mode = #tpu.pipeline_mode<synchronous>, transform_indices = @transform_6, window_bounds = array<i64: 4, 1>}, {transform_indices = @transform_7, window_bounds = array<i64: 4, 256>}]} {
    %c0 = arith.constant 0 : index
    %c0_0 = arith.constant 0 : index
    %0 = vector.load %arg1[%c0, %c0_0] : memref<16x256xf32, #tpu.memory_space<vmem>>, vector<16x256xf32>
    %c0_1 = arith.constant 0 : index
    %c0_2 = arith.constant 0 : index
    %1 = vector.load %arg2[%c0_1, %c0_2] : memref<32x16xf32, #tpu.memory_space<vmem>>, vector<32x16xf32>
    %cst = arith.constant dense<0.000000e+00> : vector<32x256xf32>
    %2 = tpu.matmul %1, %0, %cst {dimension_numbers = #tpu.dot_dimension_numbers<[1], [0], [0], [1], [0, 0, 1, 1], [], []>} : vector<32x16xf32>, vector<16x256xf32>, vector<32x256xf32> -> vector<32x256xf32>
    %c0_3 = arith.constant 0 : index
    %c0_4 = arith.constant 0 : index
    %3 = vector.load %arg3[%c0_3, %c0_4] : memref<32x1xf32, #tpu.memory_space<vmem>>, vector<32x1xf32>
    %4 = vector.broadcast %3 : vector<32x1xf32> to vector<32x256xf32>
    %5 = arith.addf %2, %4 : vector<32x256xf32>
    %cst_5 = arith.constant 0.000000e+00 : f32
    %6 = vector.broadcast %cst_5 : f32 to vector<32x256xf32>
    %7 = arith.maximumf %5, %6 : vector<32x256xf32>
    %c0_6 = arith.constant 0 : index
    %c0_7 = arith.constant 0 : index
    %8 = vector.load %arg4[%c0_6, %c0_7] : memref<32x32xf32, #tpu.memory_space<vmem>>, vector<32x32xf32>
    %cst_8 = arith.constant dense<0.000000e+00> : vector<32x256xf32>
    %9 = tpu.matmul %8, %7, %cst_8 {dimension_numbers = #tpu.dot_dimension_numbers<[1], [0], [0], [1], [0, 0, 1, 1], [], []>} : vector<32x32xf32>, vector<32x256xf32>, vector<32x256xf32> -> vector<32x256xf32>
    %c0_9 = arith.constant 0 : index
    %c0_10 = arith.constant 0 : index
    %10 = vector.load %arg5[%c0_9, %c0_10] : memref<32x1xf32, #tpu.memory_space<vmem>>, vector<32x1xf32>
    %11 = vector.broadcast %10 : vector<32x1xf32> to vector<32x256xf32>
    %12 = arith.addf %9, %11 : vector<32x256xf32>
    %cst_11 = arith.constant 0.000000e+00 : f32
    %13 = vector.broadcast %cst_11 : f32 to vector<32x256xf32>
    %14 = arith.maximumf %12, %13 : vector<32x256xf32>
    %c0_12 = arith.constant 0 : index
    %c0_13 = arith.constant 0 : index
    %15 = vector.load %arg6[%c0_12, %c0_13] : memref<4x32xf32, #tpu.memory_space<vmem>>, vector<4x32xf32>
    %cst_14 = arith.constant dense<0.000000e+00> : vector<4x256xf32>
    %16 = tpu.matmul %15, %14, %cst_14 {dimension_numbers = #tpu.dot_dimension_numbers<[1], [0], [0], [1], [0, 0, 1, 1], [], []>} : vector<4x32xf32>, vector<32x256xf32>, vector<4x256xf32> -> vector<4x256xf32>
    %c0_15 = arith.constant 0 : index
    %c0_16 = arith.constant 0 : index
    %17 = vector.load %arg7[%c0_15, %c0_16] : memref<4x1xf32, #tpu.memory_space<vmem>>, vector<4x1xf32>
    %18 = vector.broadcast %17 : vector<4x1xf32> to vector<4x256xf32>
    %19 = arith.addf %16, %18 : vector<4x256xf32>
    %20 = math.tanh %19 : vector<4x256xf32>
    %cst_17 = arith.constant 2.000000e+00 : f32
    %21 = vector.broadcast %cst_17 : f32 to vector<4x256xf32>
    %22 = arith.mulf %20, %21 : vector<4x256xf32>
    %c0_18 = arith.constant 0 : index
    %c0_19 = arith.constant 0 : index
    %23 = vector.load %arg8[%c0_18, %c0_19] : memref<4x256xf32, #tpu.memory_space<vmem>>, vector<4x256xf32>
    tpu.vector_store %arg8[%c0_18, %c0_19], %22 {strides = array<i32>} : memref<4x256xf32, #tpu.memory_space<vmem>>, vector<4x256xf32>,
    return
  }
  func.func @transform_0(%arg0: i32) -> (i32, i32) {
    %c0_i32 = arith.constant 0 : i32
    %c0_i32_0 = arith.constant 0 : i32
    return %c0_i32, %arg0 : i32, i32
  }
  func.func @transform_1(%arg0: i32) -> (i32, i32) {
    %c0_i32 = arith.constant 0 : i32
    %c0_i32_0 = arith.constant 0 : i32
    %c0_i32_1 = arith.constant 0 : i32
    return %c0_i32, %c0_i32_0 : i32, i32
  }
  func.func @transform_2(%arg0: i32) -> (i32, i32) {
    %c0_i32 = arith.constant 0 : i32
    %c0_i32_0 = arith.constant 0 : i32
    %c0_i32_1 = arith.constant 0 : i32
    return %c0_i32, %c0_i32_0 : i32, i32
  }
  func.func @transform_3(%arg0: i32) -> (i32, i32) {
    %c0_i32 = arith.constant 0 : i32
    %c0_i32_0 = arith.constant 0 : i32
    %c0_i32_1 = arith.constant 0 : i32
    return %c0_i32, %c0_i32_0 : i32, i32
  }
  func.func @transform_4(%arg0: i32) -> (i32, i32) {
    %c0_i32 = arith.constant 0 : i32
    %c0_i32_0 = arith.constant 0 : i32
    %c0_i32_1 = arith.constant 0 : i32
    return %c0_i32, %c0_i32_0 : i32, i32
  }
  func.func @transform_5(%arg0: i32) -> (i32, i32) {
    %c0_i32 = arith.constant 0 : i32
    %c0_i32_0 = arith.constant 0 : i32
    %c0_i32_1 = arith.constant 0 : i32
    return %c0_i32, %c0_i32_0 : i32, i32
  }
  func.func @transform_6(%arg0: i32) -> (i32, i32) {
    %c0_i32 = arith.constant 0 : i32
    %c0_i32_0 = arith.constant 0 : i32
    %c0_i32_1 = arith.constant 0 : i32
    return %c0_i32, %c0_i32_0 : i32, i32
  }
  func.func @transform_7(%arg0: i32) -> (i32, i32) {
    %c0_i32 = arith.constant 0 : i32
    %c0_i32_0 = arith.constant 0 : i32
    return %c0_i32, %arg0 : i32, i32
  }
}

</mosaic_0001>

<llo_original>
// kernel: tpu_custom_call.1
$region0: #{tpu_custom_call.1}
  #allocation0 [shape = 'u32[]', space=smem, size = 0x4, offset = 0x4, fixed_abs, tag = 'smem constant byte address 0x4 - core index']
  #allocation1 [shape = 'u32[144,128]{1,0:T(1,128)}', space=vmem, size = 0x12000, scoped, tag = 'internal scratch']
  %s0 = inlined_call_operand.vmem [shape: f32[16,512], index: 0, kind: input, shape index: {}]
  %s1 = inlined_call_operand.vmem [shape: f32[32,16], index: 1, kind: input, shape index: {}]
  %s2 = inlined_call_operand.vmem [shape: f32[32,1], index: 2, kind: input, shape index: {}]
  %s3 = inlined_call_operand.vmem [shape: f32[32,32], index: 3, kind: input, shape index: {}]
  %s4 = inlined_call_operand.vmem [shape: f32[32,1], index: 4, kind: input, shape index: {}]
  %s5 = inlined_call_operand.vmem [shape: f32[4,32], index: 5, kind: input, shape index: {}]
  %s6 = inlined_call_operand.vmem [shape: f32[4,1], index: 6, kind: input, shape index: {}]
  %s7 = inlined_call_operand.hbm [shape: f32[4,512], index: 7, kind: output, shape index: {}]
  %s8 = sld [smem:[#allocation0]]
  $region84: #{tpu_custom_call.1} parent=0
    _
  %s10 = ssub.s32 1, %s8
  %s11 = scalar_select 0, %s10, %s8
  $region1: #{tpu_custom_call.1} parent=0
    #allocation2 [shape = 'u8[32768]{0}', space=vmem, size = 0x8000, scoped, tag = 'input window, operand 0']
    #allocation3 [shape = 'u8[8192]{0}', space=vmem, size = 0x2000, scoped, tag = 'output window, operand 0']
    #allocation4 [shape = 's32[2]{0}', space=sflag, size = 0x8, scoped, tag = 'scoped memory for tpu_custom_call.1']
    %12 = vsyncpa [#allocation4], 0
    %s13 = scalar_lea.sflag [#allocation4], 1
    %14 = vsyncpa %s13, 0
    loop: start=0, step=1, limit=4
    $region2: #{tpu_custom_call.1} parent=1 // loop_pre_header
      _
    $region3: #{tpu_custom_call.1} parent=1 // loop_header
      %s16 = sphi 0, %s20
      %p17 = scmp.ge.s32.totalorder %s16, 4
      %s26 = sphi 0, %s28
      %s29 = sphi 0, %s26
      %s30 = sphi 0, %s29
      %s46 = sphi 0, %s30
      %s50 = sphi 0, %s50
      %s52 = sphi 0, %s50
      %s53 = sphi 0, %s52
      %s67 = sphi 0, %s53
      %s71 = sphi 0, %s71
      %s73 = sphi 0, %s71
      %s74 = sphi 0, %s73
      %s88 = sphi 0, %s74
      %s92 = sphi 0, %s92
      %s94 = sphi 0, %s92
      %s95 = sphi 0, %s94
      %s109 = sphi 0, %s95
      %s113 = sphi 0, %s113
      %s115 = sphi 0, %s113
      %s116 = sphi 0, %s115
      %s130 = sphi 0, %s116
      %s134 = sphi 0, %s134
      %s136 = sphi 0, %s134
      %s137 = sphi 0, %s136
      %s151 = sphi 0, %s137
      %s155 = sphi 0, %s155
      %s157 = sphi 0, %s155
      %s158 = sphi 0, %s157
      %s172 = sphi 0, %s158
      %s178 = sphi 0, %s180
      %s181 = sphi 0, %s178
      %s182 = sphi 0, %s181
      %s198 = sphi 0, %s182
    $region4: #{tpu_custom_call.1} parent=1 // loop_header_branch
      %19 = sbr.rel (%p17) target = $region8
    $region5: #{tpu_custom_call.1} parent=1 // loop_body
      %s21 = ssub.s32 %s16, 1
      %s22 = ssub.s32 %s16, 2
      %s23 = sadd.s32 %s16, 1
      %s24 = ssub.s32 %s16, %s23
      %p25 = scmp.eq.s32.totalorder %s24, 0
      %s27 = sadd.s32 %s26, 1
      %s28 = scalar_select %p25, %s26, %s27
      %p31 = pneg %p25
      %p32 = scmp.eq.s32.totalorder %s16, 1
      %p33 = por %p31, %p32
      %p34 = scmp.ne.s32.totalorder %s26, %s29
      %p35 = scmp.eq.s32.totalorder %s16, 0
      %p36 = por %p34, %p35
      %p37 = scmp.ne.s32.totalorder %s26, %s29
      %p38 = scmp.eq.s32.totalorder %s21, 1
      %p39 = por %p37, %p38
      %p40 = scmp.ne.s32.totalorder %s29, %s30
      %p41 = scmp.eq.s32.totalorder %s21, 0
      %p42 = por %p40, %p41
      %p43 = scmp.ne.s32.totalorder %s29, %s30
      %p44 = scmp.eq.s32.totalorder %s22, 1
      %p45 = por %p43, %p44
      %p47 = scmp.ne.s32.totalorder %s30, %s46
      %p48 = scmp.eq.s32.totalorder %s22, 0
      %p49 = por %p47, %p48
      %s51 = sadd.s32 %s50, 1
      %p54 = scmp.eq.s32.totalorder %s16, 1
      %p55 = scmp.ne.s32.totalorder %s50, %s52
      %p56 = scmp.eq.s32.totalorder %s16, 0
      %p57 = por %p55, %p56
      %p58 = scmp.ne.s32.totalorder %s50, %s52
      %p59 = scmp.eq.s32.totalorder %s21, 1
      %p60 = por %p58, %p59
      %p61 = scmp.ne.s32.totalorder %s52, %s53
      %p62 = scmp.eq.s32.totalorder %s21, 0
      %p63 = por %p61, %p62
      %p64 = scmp.ne.s32.totalorder %s52, %s53
      %p65 = scmp.eq.s32.totalorder %s22, 1
      %p66 = por %p64, %p65
      %p68 = scmp.ne.s32.totalorder %s53, %s67
      %p69 = scmp.eq.s32.totalorder %s22, 0
      %p70 = por %p68, %p69
      %s72 = sadd.s32 %s71, 1
      %p75 = scmp.eq.s32.totalorder %s16, 1
      %p76 = scmp.ne.s32.totalorder %s71, %s73
      %p77 = scmp.eq.s32.totalorder %s16, 0
      %p78 = por %p76, %p77
      %p79 = scmp.ne.s32.totalorder %s71, %s73
      %p80 = scmp.eq.s32.totalorder %s21, 1
      %p81 = por %p79, %p80
      %p82 = scmp.ne.s32.totalorder %s73, %s74
      %p83 = scmp.eq.s32.totalorder %s21, 0
      %p84 = por %p82, %p83
      %p85 = scmp.ne.s32.totalorder %s73, %s74
      %p86 = scmp.eq.s32.totalorder %s22, 1
      %p87 = por %p85, %p86
      %p89 = scmp.ne.s32.totalorder %s74, %s88
      %p90 = scmp.eq.s32.totalorder %s22, 0
      %p91 = por %p89, %p90
      %s93 = sadd.s32 %s92, 1
      %p96 = scmp.eq.s32.totalorder %s16, 1
      %p97 = scmp.ne.s32.totalorder %s92, %s94
      %p98 = scmp.eq.s32.totalorder %s16, 0
      %p99 = por %p97, %p98
      %p100 = scmp.ne.s32.totalorder %s92, %s94
      %p101 = scmp.eq.s32.totalorder %s21, 1
      %p102 = por %p100, %p101
      %p103 = scmp.ne.s32.totalorder %s94, %s95
      %p104 = scmp.eq.s32.totalorder %s21, 0
      %p105 = por %p103, %p104
      %p106 = scmp.ne.s32.totalorder %s94, %s95
      %p107 = scmp.eq.s32.totalorder %s22, 1
      %p108 = por %p106, %p107
      %p110 = scmp.ne.s32.totalorder %s95, %s109
      %p111 = scmp.eq.s32.totalorder %s22, 0
      %p112 = por %p110, %p111
      %s114 = sadd.s32 %s113, 1
      %p117 = scmp.eq.s32.totalorder %s16, 1
      %p118 = scmp.ne.s32.totalorder %s113, %s115
      %p119 = scmp.eq.s32.totalorder %s16, 0
      %p120 = por %p118, %p119
      %p121 = scmp.ne.s32.totalorder %s113, %s115
      %p122 = scmp.eq.s32.totalorder %s21, 1
      %p123 = por %p121, %p122
      %p124 = scmp.ne.s32.totalorder %s115, %s116
      %p125 = scmp.eq.s32.totalorder %s21, 0
      %p126 = por %p124, %p125
      %p127 = scmp.ne.s32.totalorder %s115, %s116
      %p128 = scmp.eq.s32.totalorder %s22, 1
      %p129 = por %p127, %p128
      %p131 = scmp.ne.s32.totalorder %s116, %s130
      %p132 = scmp.eq.s32.totalorder %s22, 0
      %p133 = por %p131, %p132
      %s135 = sadd.s32 %s134, 1
      %p138 = scmp.eq.s32.totalorder %s16, 1
      %p139 = scmp.ne.s32.totalorder %s134, %s136
      %p140 = scmp.eq.s32.totalorder %s16, 0
      %p141 = por %p139, %p140
      %p142 = scmp.ne.s32.totalorder %s134, %s136
      %p143 = scmp.eq.s32.totalorder %s21, 1
      %p144 = por %p142, %p143
      %p145 = scmp.ne.s32.totalorder %s136, %s137
      %p146 = scmp.eq.s32.totalorder %s21, 0
      %p147 = por %p145, %p146
      %p148 = scmp.ne.s32.totalorder %s136, %s137
      %p149 = scmp.eq.s32.totalorder %s22, 1
      %p150 = por %p148, %p149
      %p152 = scmp.ne.s32.totalorder %s137, %s151
      %p153 = scmp.eq.s32.totalorder %s22, 0
      %p154 = por %p152, %p153
      %s156 = sadd.s32 %s155, 1
      %p159 = scmp.eq.s32.totalorder %s16, 1
      %p160 = scmp.ne.s32.totalorder %s155, %s157
      %p161 = scmp.eq.s32.totalorder %s16, 0
      %p162 = por %p160, %p161
      %p163 = scmp.ne.s32.totalorder %s155, %s157
      %p164 = scmp.eq.s32.totalorder %s21, 1
      %p165 = por %p163, %p164
      %p166 = scmp.ne.s32.totalorder %s157, %s158
      %p167 = scmp.eq.s32.totalorder %s21, 0
      %p168 = por %p166, %p167
      %p169 = scmp.ne.s32.totalorder %s157, %s158
      %p170 = scmp.eq.s32.totalorder %s22, 1
      %p171 = por %p169, %p170
      %p173 = scmp.ne.s32.totalorder %s158, %s172
      %p174 = scmp.eq.s32.totalorder %s22, 0
      %p175 = por %p173, %p174
      %s176 = ssub.s32 %s16, %s23
      %p177 = scmp.eq.s32.totalorder %s176, 0
      %s179 = sadd.s32 %s178, 1
      %s180 = scalar_select %p177, %s178, %s179
      %p183 = pneg %p177
      %p184 = scmp.eq.s32.totalorder %s16, 1
      %p185 = por %p183, %p184
      %p186 = scmp.ne.s32.totalorder %s178, %s181
      %p187 = scmp.eq.s32.totalorder %s16, 0
      %p188 = por %p186, %p187
      %p189 = scmp.ne.s32.totalorder %s178, %s181
      %p190 = scmp.eq.s32.totalorder %s21, 1
      %p191 = por %p189, %p190
      %p192 = scmp.ne.s32.totalorder %s181, %s182
      %p193 = scmp.eq.s32.totalorder %s21, 0
      %p194 = por %p192, %p193
      %p195 = scmp.ne.s32.totalorder %s181, %s182
      %p196 = scmp.eq.s32.totalorder %s22, 1
      %p197 = por %p195, %p196
      %p199 = scmp.ne.s32.totalorder %s182, %s198
      %p200 = scmp.eq.s32.totalorder %s22, 0
      %p201 = por %p199, %p200
      %p202 = scmp.le.s32.totalorder 1, %s16
      %p203 = scmp.lt.s32.totalorder %s16, 3
      %p204 = pnand %p202, %p203
      %p205 = pneg %p204
      // Predicated region
      $region9: #{tpu_custom_call.1} parent=5 // pred_check
        _
      $region10: #{tpu_custom_call.1} parent=5 // pred_check_branch
        %207 = sbr.rel (%p204) target = $region12
      $region11: #{tpu_custom_call.1} parent=5 // pred_region
        %s208 = ssub.s32 %s16, 1
        // Predicated region
        $region13: #{tpu_custom_call.1} parent=11 // pred_check
          %p209 = pneg %p63
        $region14: #{tpu_custom_call.1} parent=11 // pred_check_branch
          %211 = sbr.rel (%p209) target = $region16
        $region15: #{tpu_custom_call.1} parent=11 // pred_region
          _
        $region16: #{tpu_custom_call.1} parent=11 // pred_fallthru
          _
        // Predicated region
        $region17: #{tpu_custom_call.1} parent=11 // pred_check
          %p212 = pneg %p84
        $region18: #{tpu_custom_call.1} parent=11 // pred_check_branch
          %214 = sbr.rel (%p212) target = $region20
        $region19: #{tpu_custom_call.1} parent=11 // pred_region
          _
        $region20: #{tpu_custom_call.1} parent=11 // pred_fallthru
          _
        // Predicated region
        $region21: #{tpu_custom_call.1} parent=11 // pred_check
          %p215 = pneg %p105
        $region22: #{tpu_custom_call.1} parent=11 // pred_check_branch
          %217 = sbr.rel (%p215) target = $region24
        $region23: #{tpu_custom_call.1} parent=11 // pred_region
          _
        $region24: #{tpu_custom_call.1} parent=11 // pred_fallthru
          _
        // Predicated region
        $region25: #{tpu_custom_call.1} parent=11 // pred_check
          %p218 = pneg %p126
        $region26: #{tpu_custom_call.1} parent=11 // pred_check_branch
          %220 = sbr.rel (%p218) target = $region28
        $region27: #{tpu_custom_call.1} parent=11 // pred_region
          _
        $region28: #{tpu_custom_call.1} parent=11 // pred_fallthru
          _
        // Predicated region
        $region29: #{tpu_custom_call.1} parent=11 // pred_check
          %p221 = pneg %p147
        $region30: #{tpu_custom_call.1} parent=11 // pred_check_branch
          %223 = sbr.rel (%p221) target = $region32
        $region31: #{tpu_custom_call.1} parent=11 // pred_region
          _
        $region32: #{tpu_custom_call.1} parent=11 // pred_fallthru
          _
        // Predicated region
        $region33: #{tpu_custom_call.1} parent=11 // pred_check
          %p224 = pneg %p168
        $region34: #{tpu_custom_call.1} parent=11 // pred_check_branch
          %226 = sbr.rel (%p224) target = $region36
        $region35: #{tpu_custom_call.1} parent=11 // pred_region
          _
        $region36: #{tpu_custom_call.1} parent=11 // pred_fallthru
          _
      $region12: #{tpu_custom_call.1} parent=5 // pred_fallthru
        _
      %p227 = scmp.lt.s32.totalorder %s16, 2
      // Predicated region
      $region37: #{tpu_custom_call.1} parent=5 // pred_check
        %p228 = pneg %p227
      $region38: #{tpu_custom_call.1} parent=5 // pred_check_branch
        %230 = sbr.rel (%p228) target = $region40
      $region39: #{tpu_custom_call.1} parent=5 // pred_region
        // Predicated region
        $region41: #{tpu_custom_call.1} parent=39 // pred_check
          %p231 = pneg %p36
        $region42: #{tpu_custom_call.1} parent=39 // pred_check_branch
          %233 = sbr.rel (%p231) target = $region44
        $region43: #{tpu_custom_call.1} parent=39 // pred_region
          %s234 = sand.u32 %s26, 1
          %s235 = sand.u32 %s26, 1
          %s236 = smul.addr %s235, 32
          %s237 = scalar_lea.vmem [#allocation2], %s236
          %s238 = smul.u32 2, %s16
          %s239 = smul.addr %s238, 8
          %s240 = scalar_lea.vmem %s0, %s239
          // Predicated region
          $region45: #{tpu_custom_call.1} parent=43 // pred_check
            _
          $region46: #{tpu_custom_call.1} parent=43 // pred_check_branch
            %242 = sbr.rel (0) target = $region48
          $region47: #{tpu_custom_call.1} parent=43 // pred_region
            // Predicated region
            $region49: #{tpu_custom_call.1} parent=47 // pred_check
              _
            $region50: #{tpu_custom_call.1} parent=47 // pred_check_branch
              %244 = sbr.rel (0) target = $region52
            $region51: #{tpu_custom_call.1} parent=47 // pred_region
              loop: start=0, step=1, limit=1
              $region53: #{tpu_custom_call.1} parent=51 // loop_pre_header
                _
              $region54: #{tpu_custom_call.1} parent=51 // loop_header
                %s246 = sphi 0, %s250
                %p247 = scmp.ge.s32.totalorder %s246, 1
                %s251 = sphi %s240, %s240
                %s252 = sphi %s237, %s237
              $region55: #{tpu_custom_call.1} parent=51 // loop_header_branch
                %249 = sbr.rel (%p247) target = $region59
              $region56: #{tpu_custom_call.1} parent=51 // loop_body
                %v253 = vld [vmem:[%s251] sm:$0xff]
                %254 = vst [vmem:[%s252] sm:$0xff] %v253
                %v255 = vld [vmem:[%s251 + $0x8] sm:$0xff]
                %256 = vst [vmem:[%s252 + $0x8] sm:$0xff] %v255
                %v257 = vld [vmem:[%s251 + $0x20] sm:$0xff]
                %258 = vst [vmem:[%s252 + $0x10] sm:$0xff] %v257
                %v259 = vld [vmem:[%s251 + $0x28] sm:$0xff]
                %260 = vst [vmem:[%s252 + $0x18] sm:$0xff] %v259
              $region57: #{tpu_custom_call.1} parent=51 // loop_footer
                %s250 = sadd.s32 1, %s246
              $region58: #{tpu_custom_call.1} parent=51 // loop_footer_branch
                %245 = sbr.rel target = $region54
              $region59: #{tpu_custom_call.1} parent=51 // loop_exit
                _
            $region52: #{tpu_custom_call.1} parent=47 // pred_fallthru
              _
            // Predicated region
            $region60: #{tpu_custom_call.1} parent=47 // pred_check
              _
            $region61: #{tpu_custom_call.1} parent=47 // pred_check_branch
              %262 = sbr.rel target = $region63
            $region62: #{tpu_custom_call.1} parent=47 // pred_region
              _
            $region63: #{tpu_custom_call.1} parent=47 // pred_fallthru
              _
          $region48: #{tpu_custom_call.1} parent=43 // pred_fallthru
            _
          %263 = vnop
        $region44: #{tpu_custom_call.1} parent=39 // pred_fallthru
          _
      $region40: #{tpu_custom_call.1} parent=5 // pred_fallthru
        _
      %p264 = scmp.le.s32.totalorder 1, %s16
      %p265 = scmp.lt.s32.totalorder %s16, 3
      %p266 = pnand %p264, %p265
      %p267 = pneg %p266
      // Predicated region
      $region64: #{tpu_custom_call.1} parent=5 // pred_check
        _
      $region65: #{tpu_custom_call.1} parent=5 // pred_check_branch
        %269 = sbr.rel (%p266) target = $region67
      $region66: #{tpu_custom_call.1} parent=5 // pred_region
        %s270 = ssub.s32 %s16, 1
        %s271 = sand.u32 %s29, 1
        %s272 = sand.u32 %s29, 1
        %s273 = smul.addr %s272, 32
        %s274 = scalar_lea.vmem [#allocation2], %s273
        // Predicated region
        $region68: #{tpu_custom_call.1} parent=66 // pred_check
          %p275 = pneg %p42
        $region69: #{tpu_custom_call.1} parent=66 // pred_check_branch
          %277 = sbr.rel (%p275) target = $region71
        $region70: #{tpu_custom_call.1} parent=66 // pred_region
          _
        $region71: #{tpu_custom_call.1} parent=66 // pred_fallthru
          _
        %s278 = sand.u32 %s29, 1
        %s279 = sand.u32 %s29, 1
        %s280 = smul.addr %s279, 32
        %s281 = scalar_lea.vmem [#allocation2], %s280
        %p282 = pneg %p42
        %p283 = pneg %p39
        %p284 = pneg %p63
        %p285 = pneg %p60
        %p286 = pneg %p84
        %p287 = pneg %p81
        %p288 = pneg %p105
        %p289 = pneg %p102
        %p290 = pneg %p126
        %p291 = pneg %p123
        %p292 = pneg %p147
        %p293 = pneg %p144
        %p294 = pneg %p168
        %p295 = pneg %p165
        %p296 = pneg %p194
        %p297 = pneg %p191
        %s298 = sand.u32 %s181, 1
        %s299 = scalar_lea.sflag [#allocation4], %s298
        %s300 = sand.u32 %s181, 1
        %s301 = smul.addr %s300, 8
        %s302 = scalar_lea.vmem [#allocation3], %s301
        %s303 = smul.u32 2, %s21
        %s304 = smul.u32 2, %s21
        %v305 = vld [vmem:[%s274] sm:$0xff]
        %v306 = vld [vmem:[%s274 + $0x8] sm:$0xff]
        %v307 = vld [vmem:[%s274 + $0x10] sm:$0xff]
        %v308 = vld [vmem:[%s274 + $0x18] sm:$0xff]
        %v309 = vld [vmem:[%s1] sm:$0xff]
        %v310 = vld [vmem:[%s1 + $0x8] sm:$0xff]
        %v311 = vld [vmem:[%s1 + $0x10] sm:$0xff]
        %v312 = vld [vmem:[%s1 + $0x18] sm:$0xff]
        %v313 = vld [vmem:[%s2] sm:$0xff]
        %v314 = vld [vmem:[%s2 + $0x8] sm:$0xff]
        %v315 = vld [vmem:[%s2 + $0x10] sm:$0xff]
        %v316 = vld [vmem:[%s2 + $0x18] sm:$0xff]
        %318 = vset.pattern.permute.xlu0 0
        %319 = vperm.xlu0 %318, %v313
        %v320 = vpop.permute.xlu0 %319
        %323 = vset.pattern.permute.xlu0 0
        %324 = vperm.xlu0 %323, %v314
        %v325 = vpop.permute.xlu0 %324
        %328 = vset.pattern.permute.xlu0 0
        %329 = vperm.xlu0 %328, %v315
        %v330 = vpop.permute.xlu0 %329
        %333 = vset.pattern.permute.xlu0 0
        %334 = vperm.xlu0 %333, %v316
        %v335 = vpop.permute.xlu0 %334
        %vm337 = vcmask 130048
        %v339 = vsel %vm337, %v309, 0
        %v342 = vsel %vm337, %v310, 0
        %v345 = vsel %vm337, %v311, 0
        %v348 = vsel %vm337, %v312, 0
        %350 = vmatprep.subr.mxu0 0.0
        %351 = vmatpush1.msra.mxu0 0.0
        %352 = vmatprep.subr.mxu0 0.0
        %353 = vmatpush1.msra.mxu0 0.0
        %354 = vmatprep.subr.mxu0 0.0
        %355 = vmatpush1.msra.mxu0 0.0
        %356 = vmatprep.subr.mxu0 0.0
        %357 = vmatpush1.msra.mxu0 0.0
        %358 = vmatprep.subr.mxu0 0.0
        %359 = vmatpush1.msra.mxu0 0.0
        %360 = vmatprep.subr.mxu0 0.0
        %361 = vmatpush1.msra.mxu0 0.0
        %362 = vmatprep.subr.mxu0 0.0
        %363 = vmatpush1.msra.mxu0 0.0
        %364 = vmatprep.subr.mxu0 0.0
        %365 = vmatpush1.msra.mxu0 0.0
        %366 = vmatprep.subr.mxu0 0.0
        %367 = vmatpush1.msra.mxu0 0.0
        %368 = vmatprep.subr.mxu0 0.0
        %369 = vmatpush1.msra.mxu0 0.0
        %370 = vmatprep.subr.mxu0 0.0
        %371 = vmatpush1.msra.mxu0 0.0
        %372 = vmatprep.subr.mxu0 0.0
        %373 = vmatpush1.msra.mxu0 0.0
        %374 = vmatprep.subr.mxu0 0.0
        %375 = vmatpush1.msra.mxu0 0.0
        %376 = vmatprep.subr.mxu0 0.0
        %377 = vmatpush1.msra.mxu0 0.0
        %378 = vmatprep.subr.mxu0 %v308
        %379 = vmatpush1.msra.mxu0 %v307
        %380 = vmatprep.subr.mxu0 %v306
        %381 = vmatpush1.msra.mxu0 %v305
        %382 = vmatprep.subr.mxu0 0.0
        %383 = vmatpush2.msra.mxu0 0.0
        %384 = vmatprep.subr.mxu0 0.0
        %385 = vmatpush2.msra.mxu0 0.0
        %386 = vmatprep.subr.mxu0 0.0
        %387 = vmatpush2.msra.mxu0 0.0
        %388 = vmatprep.subr.mxu0 0.0
        %389 = vmatpush2.msra.mxu0 0.0
        %390 = vmatprep.subr.mxu0 0.0
        %391 = vmatpush2.msra.mxu0 0.0
        %392 = vmatprep.subr.mxu0 0.0
        %393 = vmatpush2.msra.mxu0 0.0
        %394 = vmatprep.subr.mxu0 0.0
        %395 = vmatpush2.msra.mxu0 0.0
        %396 = vmatprep.subr.mxu0 0.0
        %397 = vmatpush2.msra.mxu0 0.0
        %398 = vmatprep.subr.mxu0 0.0
        %399 = vmatpush2.msra.mxu0 0.0
        %400 = vmatprep.subr.mxu0 0.0
        %401 = vmatpush2.msra.mxu0 0.0
        %402 = vmatprep.subr.mxu0 0.0
        %403 = vmatpush2.msra.mxu0 0.0
        %404 = vmatprep.subr.mxu0 0.0
        %405 = vmatpush2.msra.mxu0 0.0
        %406 = vmatprep.subr.mxu0 0.0
        %407 = vmatpush2.msra.mxu0 0.0
        %408 = vmatprep.subr.mxu0 0.0
        %409 = vmatpush2.msra.mxu0 0.0
        %410 = vmatprep.subr.mxu0 0.0
        %411 = vmatpush2.msra.mxu0 0.0
        %412 = vmatprep.subr.mxu0 0.0
        %413 = vmatpush2.msra.mxu0 0.0
        %414 = vmatprep.mubr.f32.mxu0 0.0
        %415 = vmatmul.mubr.f32.gmra.mxu0 %v339
        %v416 = vpop.f32.mrf.mxu0
        %v417 = vadd.f32 %v320, %v416
        %v418 = vpop.f32.mrf.mxu0
        %v419 = vadd.f32 %v320, %v418
        %420 = vmatprep.mubr.f32.mxu0 0.0
        %421 = vmatmul.mubr.f32.gmra.mxu0 %v342
        %v422 = vpop.f32.mrf.mxu0
        %v423 = vadd.f32 %v325, %v422
        %v424 = vpop.f32.mrf.mxu0
        %v425 = vadd.f32 %v325, %v424
        %426 = vmatprep.mubr.f32.mxu0 0.0
        %427 = vmatmul.mubr.f32.gmra.mxu0 %v345
        %v428 = vpop.f32.mrf.mxu0
        %v429 = vadd.f32 %v330, %v428
        %v430 = vpop.f32.mrf.mxu0
        %v431 = vadd.f32 %v330, %v430
        %432 = vmatprep.mubr.f32.mxu0 0.0
        %433 = vmatmul.mubr.f32.gmra.mxu0 %v348
        %v434 = vpop.f32.mrf.mxu0
        %v435 = vadd.f32 %v335, %v434
        %v436 = vpop.f32.mrf.mxu0
        %v437 = vadd.f32 %v335, %v436
        %438 = vdwg.mxu0
        %v439 = vmax.f32 %v417, 0.0
        %v440 = vmax.f32 %v419, 0.0
        %v441 = vmax.f32 %v423, 0.0
        %v442 = vmax.f32 %v425, 0.0
        %v443 = vmax.f32 %v429, 0.0
        %v444 = vmax.f32 %v431, 0.0
        %v445 = vmax.f32 %v435, 0.0
        %v446 = vmax.f32 %v437, 0.0
        %v447 = vld [vmem:[%s3] sm:$0xff]
        %v448 = vld [vmem:[%s3 + $0x8] sm:$0xff]
        %v449 = vld [vmem:[%s3 + $0x10] sm:$0xff]
        %v450 = vld [vmem:[%s3 + $0x18] sm:$0xff]
        %v451 = vld [vmem:[%s4] sm:$0xff]
        %v452 = vld [vmem:[%s4 + $0x8] sm:$0xff]
        %v453 = vld [vmem:[%s4 + $0x10] sm:$0xff]
        %v454 = vld [vmem:[%s4 + $0x18] sm:$0xff]
        %456 = vset.pattern.permute.xlu0 0
        %457 = vperm.xlu0 %456, %v451
        %v458 = vpop.permute.xlu0 %457
        %461 = vset.pattern.permute.xlu0 0
        %462 = vperm.xlu0 %461, %v452
        %v463 = vpop.permute.xlu0 %462
        %466 = vset.pattern.permute.xlu0 0
        %467 = vperm.xlu0 %466, %v453
        %v468 = vpop.permute.xlu0 %467
        %471 = vset.pattern.permute.xlu0 0
        %472 = vperm.xlu0 %471, %v454
        %v473 = vpop.permute.xlu0 %472
        %vm475 = vcmask 261120
        %v477 = vsel %vm475, %v447, 0
        %v480 = vsel %vm475, %v448, 0
        %v483 = vsel %vm475, %v449, 0
        %v486 = vsel %vm475, %v450, 0
        %488 = vmatprep.subr.mxu0 0.0
        %489 = vmatpush1.msra.mxu0 0.0
        %490 = vmatprep.subr.mxu0 0.0
        %491 = vmatpush1.msra.mxu0 0.0
        %492 = vmatprep.subr.mxu0 0.0
        %493 = vmatpush1.msra.mxu0 0.0
        %494 = vmatprep.subr.mxu0 0.0
        %495 = vmatpush1.msra.mxu0 0.0
        %496 = vmatprep.subr.mxu0 0.0
        %497 = vmatpush1.msra.mxu0 0.0
        %498 = vmatprep.subr.mxu0 0.0
        %499 = vmatpush1.msra.mxu0 0.0
        %500 = vmatprep.subr.mxu0 0.0
        %501 = vmatpush1.msra.mxu0 0.0
        %502 = vmatprep.subr.mxu0 0.0
        %503 = vmatpush1.msra.mxu0 0.0
        %504 = vmatprep.subr.mxu0 0.0
        %505 = vmatpush1.msra.mxu0 0.0
        %506 = vmatprep.subr.mxu0 0.0
        %507 = vmatpush1.msra.mxu0 0.0
        %508 = vmatprep.subr.mxu0 0.0
        %509 = vmatpush1.msra.mxu0 0.0
        %510 = vmatprep.subr.mxu0 0.0
        %511 = vmatpush1.msra.mxu0 0.0
        %512 = vmatprep.subr.mxu0 %v446
        %513 = vmatpush1.msra.mxu0 %v445
        %514 = vmatprep.subr.mxu0 %v444
        %515 = vmatpush1.msra.mxu0 %v443
        %516 = vmatprep.subr.mxu0 %v442
        %517 = vmatpush1.msra.mxu0 %v441
        %518 = vmatprep.subr.mxu0 %v440
        %519 = vmatpush1.msra.mxu0 %v439
        %520 = vmatprep.subr.mxu0 0.0
        %521 = vmatpush2.msra.mxu0 0.0
        %522 = vmatprep.subr.mxu0 0.0
        %523 = vmatpush2.msra.mxu0 0.0
        %524 = vmatprep.subr.mxu0 0.0
        %525 = vmatpush2.msra.mxu0 0.0
        %526 = vmatprep.subr.mxu0 0.0
        %527 = vmatpush2.msra.mxu0 0.0
        %528 = vmatprep.subr.mxu0 0.0
        %529 = vmatpush2.msra.mxu0 0.0
        %530 = vmatprep.subr.mxu0 0.0
        %531 = vmatpush2.msra.mxu0 0.0
        %532 = vmatprep.subr.mxu0 0.0
        %533 = vmatpush2.msra.mxu0 0.0
        %534 = vmatprep.subr.mxu0 0.0
        %535 = vmatpush2.msra.mxu0 0.0
        %536 = vmatprep.subr.mxu0 0.0
        %537 = vmatpush2.msra.mxu0 0.0
        %538 = vmatprep.subr.mxu0 0.0
        %539 = vmatpush2.msra.mxu0 0.0
        %540 = vmatprep.subr.mxu0 0.0
        %541 = vmatpush2.msra.mxu0 0.0
        %542 = vmatprep.subr.mxu0 0.0
        %543 = vmatpush2.msra.mxu0 0.0
        %544 = vmatprep.subr.mxu0 0.0
        %545 = vmatpush2.msra.mxu0 0.0
        %546 = vmatprep.subr.mxu0 0.0
        %547 = vmatpush2.msra.mxu0 0.0
        %548 = vmatprep.subr.mxu0 0.0
        %549 = vmatpush2.msra.mxu0 0.0
        %550 = vmatprep.subr.mxu0 0.0
        %551 = vmatpush2.msra.mxu0 0.0
        %552 = vmatprep.mubr.f32.mxu0 0.0
        %553 = vmatmul.mubr.f32.gmra.mxu0 %v477
        %v554 = vpop.f32.mrf.mxu0
        %v555 = vadd.f32 %v458, %v554
        %v556 = vpop.f32.mrf.mxu0
        %v557 = vadd.f32 %v458, %v556
        %558 = vmatprep.mubr.f32.mxu0 0.0
        %559 = vmatmul.mubr.f32.gmra.mxu0 %v480
        %v560 = vpop.f32.mrf.mxu0
        %v561 = vadd.f32 %v463, %v560
        %v562 = vpop.f32.mrf.mxu0
        %v563 = vadd.f32 %v463, %v562
        %564 = vmatprep.mubr.f32.mxu0 0.0
        %565 = vmatmul.mubr.f32.gmra.mxu0 %v483
        %v566 = vpop.f32.mrf.mxu0
        %v567 = vadd.f32 %v468, %v566
        %v568 = vpop.f32.mrf.mxu0
        %v569 = vadd.f32 %v468, %v568
        %570 = vmatprep.mubr.f32.mxu0 0.0
        %571 = vmatmul.mubr.f32.gmra.mxu0 %v486
        %v572 = vpop.f32.mrf.mxu0
        %v573 = vadd.f32 %v473, %v572
        %v574 = vpop.f32.mrf.mxu0
        %v575 = vadd.f32 %v473, %v574
        %576 = vdwg.mxu0
        %v577 = vmax.f32 %v555, 0.0
        %v578 = vmax.f32 %v557, 0.0
        %v579 = vmax.f32 %v561, 0.0
        %v580 = vmax.f32 %v563, 0.0
        %v581 = vmax.f32 %v567, 0.0
        %v582 = vmax.f32 %v569, 0.0
        %v583 = vmax.f32 %v573, 0.0
        %v584 = vmax.f32 %v575, 0.0
        %v585 = vld [vmem:[%s5] sm:$0xf]
        %v586 = vld [vmem:[%s6] sm:$0xf]
        %588 = vset.pattern.permute.xlu0 0
        %589 = vperm.xlu0 %588, %v586
        %v590 = vpop.permute.xlu0 %589
        %v593 = vsel %vm475, %v585, 0
        %595 = vmatprep.subr.mxu0 0.0
        %596 = vmatpush1.msra.mxu0 0.0
        %597 = vmatprep.subr.mxu0 0.0
        %598 = vmatpush1.msra.mxu0 0.0
        %599 = vmatprep.subr.mxu0 0.0
        %600 = vmatpush1.msra.mxu0 0.0
        %601 = vmatprep.subr.mxu0 0.0
        %602 = vmatpush1.msra.mxu0 0.0
        %603 = vmatprep.subr.mxu0 0.0
        %604 = vmatpush1.msra.mxu0 0.0
        %605 = vmatprep.subr.mxu0 0.0
        %606 = vmatpush1.msra.mxu0 0.0
        %607 = vmatprep.subr.mxu0 0.0
        %608 = vmatpush1.msra.mxu0 0.0
        %609 = vmatprep.subr.mxu0 0.0
        %610 = vmatpush1.msra.mxu0 0.0
        %611 = vmatprep.subr.mxu0 0.0
        %612 = vmatpush1.msra.mxu0 0.0
        %613 = vmatprep.subr.mxu0 0.0
        %614 = vmatpush1.msra.mxu0 0.0
        %615 = vmatprep.subr.mxu0 0.0
        %616 = vmatpush1.msra.mxu0 0.0
        %617 = vmatprep.subr.mxu0 0.0
        %618 = vmatpush1.msra.mxu0 0.0
        %619 = vmatprep.subr.mxu0 %v584
        %620 = vmatpush1.msra.mxu0 %v583
        %621 = vmatprep.subr.mxu0 %v582
        %622 = vmatpush1.msra.mxu0 %v581
        %623 = vmatprep.subr.mxu0 %v580
        %624 = vmatpush1.msra.mxu0 %v579
        %625 = vmatprep.subr.mxu0 %v578
        %626 = vmatpush1.msra.mxu0 %v577
        %627 = vmatprep.subr.mxu0 0.0
        %628 = vmatpush2.msra.mxu0 0.0
        %629 = vmatprep.subr.mxu0 0.0
        %630 = vmatpush2.msra.mxu0 0.0
        %631 = vmatprep.subr.mxu0 0.0
        %632 = vmatpush2.msra.mxu0 0.0
        %633 = vmatprep.subr.mxu0 0.0
        %634 = vmatpush2.msra.mxu0 0.0
        %635 = vmatprep.subr.mxu0 0.0
        %636 = vmatpush2.msra.mxu0 0.0
        %637 = vmatprep.subr.mxu0 0.0
        %638 = vmatpush2.msra.mxu0 0.0
        %639 = vmatprep.subr.mxu0 0.0
        %640 = vmatpush2.msra.mxu0 0.0
        %641 = vmatprep.subr.mxu0 0.0
        %642 = vmatpush2.msra.mxu0 0.0
        %643 = vmatprep.subr.mxu0 0.0
        %644 = vmatpush2.msra.mxu0 0.0
        %645 = vmatprep.subr.mxu0 0.0
        %646 = vmatpush2.msra.mxu0 0.0
        %647 = vmatprep.subr.mxu0 0.0
        %648 = vmatpush2.msra.mxu0 0.0
        %649 = vmatprep.subr.mxu0 0.0
        %650 = vmatpush2.msra.mxu0 0.0
        %651 = vmatprep.subr.mxu0 0.0
        %652 = vmatpush2.msra.mxu0 0.0
        %653 = vmatprep.subr.mxu0 0.0
        %654 = vmatpush2.msra.mxu0 0.0
        %655 = vmatprep.subr.mxu0 0.0
        %656 = vmatpush2.msra.mxu0 0.0
        %657 = vmatprep.subr.mxu0 0.0
        %658 = vmatpush2.msra.mxu0 0.0
        %659 = vmatprep.mubr.f32.mxu0 0.0
        %660 = vmatmul.mubr.f32.gmra.mxu0 %v593
        %v661 = vpop.f32.mrf.mxu0
        %v662 = vadd.f32 %v590, %v661
        %v663 = vpop.f32.mrf.mxu0
        %v664 = vadd.f32 %v590, %v663
        %665 = vdwg.mxu0
        %v666 = vtanh.pop %v662
        %v667 = vtanh.pop %v664
        %v668 = vmul.f32 %v666, 2.0
        %v669 = vmul.f32 %v667, 2.0
        %v672 = vcombine.low %v668, %v669
        %674 = vst [vmem:[%s302] sm:$0xff] %v672
        %s675 = sand.u32 %s181, 1
        %s676 = scalar_lea.sflag [#allocation4], %s675
        %s677 = sand.u32 %s181, 1
        %s678 = smul.addr %s677, 8
        %s679 = scalar_lea.vmem [#allocation3], %s678
        // Predicated region
        $region72: #{tpu_custom_call.1} parent=66 // pred_check
          %p680 = pneg %p191
        $region73: #{tpu_custom_call.1} parent=66 // pred_check_branch
          %682 = sbr.rel (%p680) target = $region75
        $region74: #{tpu_custom_call.1} parent=66 // pred_region
          %s683 = smul.u32 2, %s21
          %s685 = ssub.s32 128, 128
          %686 = vsyncadd %s676, %s685
          %s687 = smul.addr %s683, 64
          %s688 = scalar_lea.hbm %s7, %s687
          %s690 = sshll.u32 %s679, 4
          %s691 = int_to_ptr.vmem [resolvable:$true] %s690
          %693 = dma.vmem_to_hbm [thread:$0]  %s691, 128, %s688, %s676
        $region75: #{tpu_custom_call.1} parent=66 // pred_fallthru
          _
      $region67: #{tpu_custom_call.1} parent=5 // pred_fallthru
        _
      %p694 = scmp.le.s32.totalorder 2, %s16
      // Predicated region
      $region76: #{tpu_custom_call.1} parent=5 // pred_check
        %p695 = pneg %p694
      $region77: #{tpu_custom_call.1} parent=5 // pred_check_branch
        %697 = sbr.rel (%p695) target = $region79
      $region78: #{tpu_custom_call.1} parent=5 // pred_region
        %s698 = ssub.s32 %s16, 2
        // Predicated region
        $region80: #{tpu_custom_call.1} parent=78 // pred_check
          %p699 = pneg %p197
        $region81: #{tpu_custom_call.1} parent=78 // pred_check_branch
          %701 = sbr.rel (%p699) target = $region83
        $region82: #{tpu_custom_call.1} parent=78 // pred_region
          %s702 = sand.u32 %s182, 1
          %s703 = scalar_lea.sflag [#allocation4], %s702
          %s704 = sand.u32 %s182, 1
          %s705 = smul.addr %s704, 8
          %s706 = scalar_lea.vmem [#allocation3], %s705
          %707 = dma.done %s703, 128
        $region83: #{tpu_custom_call.1} parent=78 // pred_fallthru
          _
      $region79: #{tpu_custom_call.1} parent=5 // pred_fallthru
        _
    $region6: #{tpu_custom_call.1} parent=1 // loop_footer
      %s20 = sadd.s32 1, %s16
    $region7: #{tpu_custom_call.1} parent=1 // loop_footer_branch
      %15 = sbr.rel target = $region3
    $region8: #{tpu_custom_call.1} parent=1 // loop_exit
      _
    %708 = vsyncpa [#allocation4], 1
    %s709 = scalar_lea.sflag [#allocation4], 1
    %710 = vsyncpa %s709, 1

</llo_original>
